<compile_context>
chip_gen: v7x
topology: tpu7x:2x2x1
jax: 0.10.0
libtpu: 0.0.40
codegen_flags: <defaults>
</compile_context>

<pallas_src>
import jax
import jax.numpy as jnp
from jax.experimental import pallas as pl
from jax.experimental.pallas import tpu as pltpu


# ----------------------------------------------------------------------------
# Pallas kernel: one batch element per grid step, (C, P) lane-dense layout.
# ----------------------------------------------------------------------------
def scag_kernel(bsp_ref,                    # SMEM (1,)  spatial-branch bias
                e_ref, d_ref,               # (1, Ce, P), (1, Cd, P)
                wspe_ref, wspd_ref,         # (1, Ce), (1, Cd)   fc1+conv11 folded
                w3e_ref, w3d_ref, b3_ref,   # (Cm, Ce), (Cm, Cd), (Cm, 1)
                w4_ref, b4_ref,             # (Co, Cm), (Co, 1)
                w5_ref, b5_ref,             # (Co, Ce), (Co, 1)
                out_ref):                   # (1, Co, P)
    e = e_ref[0]                            # (Ce, P)
    d = d_ref[0]                            # (Cd, P)

    # ---- spatial attention branch -------------------------------------------
    # conv11(cat[e, e, fc1(e)]) + conv11(cat[d, d, fc1(d)]) folded into a single
    # (1, C) row per branch plus one scalar bias -> two tiny (1,C)@(C,P) matmuls.
    sp_pre = (jnp.dot(wspe_ref[...], e, preferred_element_type=jnp.float32)
              + jnp.dot(wspd_ref[...], d, preferred_element_type=jnp.float32)
              + bsp_ref[0])                                           # (1, P)
    sp = jax.nn.sigmoid(jnp.maximum(sp_pre, 0.0))                     # (1, P)

    enc = e * sp                                                      # (Ce, P)
    enc5 = (jnp.dot(w5_ref[...], enc, preferred_element_type=jnp.float32)
            + b5_ref[...])                                            # (Co, P)

    # ---- channel attention branch (global avg/max pools over pixels) --------
    # fc3(avg) + fc3(max) == w3 @ (avg + max) + 2*b3  (bias already doubled).
    e_pool = (jnp.mean(e, axis=1, keepdims=True)
              + jnp.max(e, axis=1, keepdims=True))                    # (Ce, 1)
    d_pool = (jnp.mean(d, axis=1, keepdims=True)
              + jnp.max(d, axis=1, keepdims=True))                    # (Cd, 1)
    ch = (jnp.dot(w3e_ref[...], e_pool, preferred_element_type=jnp.float32)
          + jnp.dot(w3d_ref[...], d_pool, preferred_element_type=jnp.float32)
          + b3_ref[...])                                              # (Cm, 1)
    ch4 = (jnp.dot(w4_ref[...], ch, preferred_element_type=jnp.float32)
           + b4_ref[...])                                             # (Co, 1)
    ch_out = jax.nn.sigmoid(jnp.maximum(ch4, 0.0))                    # (Co, 1)

    out_ref[0] = enc5 * ch_out                                        # (Co, P)


# ----------------------------------------------------------------------------
# Wrapper: BN folding, fc1->conv11 fold, weight transposes, pallas_call.
# ----------------------------------------------------------------------------
def _fold_bn(w, b, gamma, beta, mean, var, eps=1e-5):
    """Fold eval-mode BatchNorm into a matmul-view conv (w: (Cin,Cout), b: (Cout,))."""
    s = gamma / jnp.sqrt(var + eps)
    return w * s, (b - mean) * s + beta


def scag_forward(e_nchw, d_nchw, params):
    B, Ce, H, W = e_nchw.shape
    Cd = d_nchw.shape[1]
    P = H * W

    # NCHW flattened -> (B, C, P): natively lane-dense, no transposes needed.
    e = e_nchw.reshape(B, Ce, P)
    d = d_nchw.reshape(B, Cd, P)

    # --- fold BN into convs ---------------------------------------------------
    w1e, b1e = _fold_bn(params['w1e'], params['b1e'], *params['bn1e'])
    w1d, b1d = _fold_bn(params['w1d'], params['b1d'], *params['bn1d'])
    w3e, b3e = _fold_bn(params['w3e'], params['b3e'], *params['bn3e'])
    w3d, b3d = _fold_bn(params['w3d'], params['b3d'], *params['bn3d'])
    w4, b4 = _fold_bn(params['w4'], params['b4'], *params['bn4'])
    w5, b5 = _fold_bn(params['w5'], params['b5'], *params['bn5'])
    Cm, Co = w4.shape

    # --- fold fc1 into conv11 (spatial branch) --------------------------------
    # conv11 input is cat([e_avg, e_max, fc1(e)]) with e_avg == e_max == e:
    #   e_out = e @ (wa + wb + wc*w1e_f) + (wc*b1e_f + b11e)
    w11e = params['w11e'][:, 0]                       # (2*Ce + 1,)
    w11d = params['w11d'][:, 0]                       # (2*Cd + 1,)
    wce = w11e[2 * Ce]
    wcd = w11d[2 * Cd]
    wspe = (w11e[:Ce] + w11e[Ce:2 * Ce] + wce * w1e[:, 0]).reshape(1, Ce)
    wspd = (w11d[:Cd] + w11d[Cd:2 * Cd] + wcd * w1d[:, 0]).reshape(1, Cd)
    b_sp = jnp.reshape(wce * b1e[0] + params['b11e'][0]
                       + wcd * b1d[0] + params['b11d'][0], (1,)).astype(jnp.float32)

    # --- channel branch weights in (C, P)-friendly transposed form ------------
    w3e_t = w3e.T                                     # (Cm, Ce)
    w3d_t = w3d.T                                     # (Cm, Cd)
    b3_col = (2.0 * (b3e + b3d)).reshape(Cm, 1)       # avg+max merged bias
    w4_t = w4.T                                       # (Co, Cm)
    b4_col = b4.reshape(Co, 1)
    w5_t = w5.T                                       # (Co, Ce)
    b5_col = b5.reshape(Co, 1)

    full = lambda shape: pl.BlockSpec(shape, lambda b: (0, 0))

    # VMEM budget: ~2x double-buffered e/d/out blocks + padded weights + slack.
    block_bytes = 4 * P * (Ce + Cd + Co)
    vmem_limit = int(min(max(4 * block_bytes + (4 << 20), 32 << 20), 64 << 20))

    out = pl.pallas_call(
        scag_kernel,
        out_shape=jax.ShapeDtypeStruct((B, Co, P), jnp.float32),
        grid=(B,),
        in_specs=[
            pl.BlockSpec(memory_space=pltpu.MemorySpace.SMEM),   # b_sp scalar
            pl.BlockSpec((1, Ce, P), lambda b: (b, 0, 0)),       # e
            pl.BlockSpec((1, Cd, P), lambda b: (b, 0, 0)),       # d
            full((1, Ce)), full((1, Cd)),                        # spatial rows
            full((Cm, Ce)), full((Cm, Cd)), full((Cm, 1)),       # fc3 (merged)
            full((Co, Cm)), full((Co, 1)),                       # fc4
            full((Co, Ce)), full((Co, 1)),                       # fc5
        ],
        out_specs=pl.BlockSpec((1, Co, P), lambda b: (b, 0, 0)),
        compiler_params=pltpu.CompilerParams(
            dimension_semantics=("parallel",),
            vmem_limit_bytes=vmem_limit),
    )(b_sp, e, d, wspe, wspd, w3e_t, w3d_t, b3_col, w4_t, b4_col, w5_t, b5_col)

    # (B, Co, P) is already NCHW-flattened.
    return out.reshape(B, Co, H, W)


# ----------------------------------------------------------------------------
# Plain-JAX reference (unfolded weights, explicit eval-mode BN).
# ----------------------------------------------------------------------------
def scag_reference(e_nchw, d_nchw, p):
    B, Ce, H, W = e_nchw.shape
    Cd = d_nchw.shape[1]
    P = H * W
    e = jnp.transpose(e_nchw, (0, 2, 3, 1)).reshape(B, P, Ce)
    d = jnp.transpose(d_nchw, (0, 2, 3, 1)).reshape(B, P, Cd)

    def bn(x, gamma, beta, mean, var, eps=1e-5):
        return (x - mean) / jnp.sqrt(var + eps) * gamma + beta

    e_conv1 = bn(e @ p['w1e'] + p['b1e'], *p['bn1e'])
    d_conv1 = bn(d @ p['w1d'] + p['b1d'], *p['bn1d'])
    e_x = jnp.concatenate([e, e, e_conv1], axis=-1)     # avg_pool/max_pool == id
    d_x = jnp.concatenate([d, d, d_conv1], axis=-1)
    e_out = e_x @ p['w11e'] + p['b11e']
    d_out = d_x @ p['w11d'] + p['b11d']
    sp = jax.nn.sigmoid(jnp.maximum(e_out + d_out, 0.0))
    enc = e * sp

    e_av = e.mean(axis=1, keepdims=True)
    e_mx = e.max(axis=1, keepdims=True)
    d_av = d.mean(axis=1, keepdims=True)
    d_mx = d.max(axis=1, keepdims=True)
    f3e = lambda x: bn(x @ p['w3e'] + p['b3e'], *p['bn3e'])
    f3d = lambda x: bn(x @ p['w3d'] + p['b3d'], *p['bn3d'])
    ch = (f3e(e_av) + f3e(e_mx)) + (f3d(d_av) + f3d(d_mx))
    ch4 = bn(ch @ p['w4'] + p['b4'], *p['bn4'])
    ch_out = jax.nn.sigmoid(jnp.maximum(ch4, 0.0))

    enc5 = bn(enc @ p['w5'] + p['b5'], *p['bn5'])
    out = ch_out * enc5                                  # (B, P, Co)
    Co = out.shape[-1]
    return jnp.transpose(out.reshape(B, H, W, Co), (0, 3, 1, 2))


# ----------------------------------------------------------------------------
# Deterministic parameter construction.
# ----------------------------------------------------------------------------
def make_params(key, ch_enc_skip, ch_deconv, out_channels, N=16):
    cm = ch_deconv // N

    def nrm(k, shape, scale=0.1):
        return scale * jax.random.normal(k, shape, jnp.float32)

    def bn_params(k, c):
        k1, k2, k3, k4 = jax.random.split(k, 4)
        gamma = jax.random.uniform(k1, (c,), jnp.float32, 0.5, 1.5)
        beta = nrm(k2, (c,))
        mean = nrm(k3, (c,))
        var = jax.random.uniform(k4, (c,), jnp.float32, 0.5, 1.5)
        return (gamma, beta, mean, var)

    ks = jax.random.split(key, 20)
    params = {
        'w1e': nrm(ks[0], (ch_enc_skip, 1)), 'b1e': nrm(ks[1], (1,)),
        'bn1e': bn_params(ks[2], 1),
        'w1d': nrm(ks[3], (ch_deconv, 1)), 'b1d': nrm(ks[4], (1,)),
        'bn1d': bn_params(ks[5], 1),
        'w11e': nrm(ks[6], (2 * ch_enc_skip + 1, 1)), 'b11e': nrm(ks[7], (1,)),
        'w11d': nrm(ks[8], (2 * ch_deconv + 1, 1)), 'b11d': nrm(ks[9], (1,)),
        'w3e': nrm(ks[10], (ch_enc_skip, cm)), 'b3e': nrm(ks[11], (cm,)),
        'bn3e': bn_params(ks[12], cm),
        'w3d': nrm(ks[13], (ch_deconv, cm)), 'b3d': nrm(ks[14], (cm,)),
        'bn3d': bn_params(ks[15], cm),
        'w4': nrm(ks[16], (cm, out_channels)), 'b4': nrm(ks[17], (out_channels,)),
        'bn4': bn_params(ks[18], out_channels),
        'w5': nrm(ks[19], (ch_enc_skip, out_channels)),
        'b5': jnp.zeros((out_channels,), jnp.float32),
        'bn5': bn_params(jax.random.fold_in(key, 99), out_channels),
    }
    return params


if __name__ == "__main__":
    # Small shapes: batch=2, ch_enc_skip=4, ch_deconv=32, out_channels=8, 16x16.
    B, Ce, Cd, Co, H, W, N = 2, 4, 32, 8, 16, 16, 16

    key = jax.random.PRNGKey(0)
    k_e, k_d, k_p = jax.random.split(key, 3)
    e = jax.random.normal(k_e, (B, Ce, H, W), jnp.float32)
    d = jax.random.normal(k_d, (B, Cd, H, W), jnp.float32)
    params = make_params(k_p, Ce, Cd, Co, N=N)

    out = jax.block_until_ready(scag_forward(e, d, params))
    ref = jax.block_until_ready(scag_reference(e, d, params))

    assert out.shape == (B, Co, H, W), out.shape
    # atol slightly loosened vs v1: BN + fc1->conv11 + avg/max-merge folds
    # re-associate f32 math (exact algebraically, ~1e-6 rounding differences).
    assert jnp.allclose(out, ref, atol=2e-5, rtol=1e-4), (
        float(jnp.max(jnp.abs(out - ref))))
    print("KERNEL_OK")
</pallas_src>

<mosaic_0001>
module attributes {stable_mosaic.version = 11 : i64} {
  func.func @scag_kernel(%arg0: i32, %arg1: memref<1xf32, #tpu.memory_space<smem>>, %arg2: memref<1x4x256xf32, #tpu.memory_space<vmem>>, %arg3: memref<1x32x256xf32, #tpu.memory_space<vmem>>, %arg4: memref<1x4xf32, #tpu.memory_space<vmem>>, %arg5: memref<1x32xf32, #tpu.memory_space<vmem>>, %arg6: memref<2x4xf32, #tpu.memory_space<vmem>>, %arg7: memref<2x32xf32, #tpu.memory_space<vmem>>, %arg8: memref<2x1xf32, #tpu.memory_space<vmem>>, %arg9: memref<8x2xf32, #tpu.memory_space<vmem>>, %arg10: memref<8x1xf32, #tpu.memory_space<vmem>>, %arg11: memref<8x4xf32, #tpu.memory_space<vmem>>, %arg12: memref<8x1xf32, #tpu.memory_space<vmem>>, %arg13: memref<1x8x256xf32, #tpu.memory_space<vmem>>) attributes {dimension_semantics = [#tpu.dimension_semantics<parallel>], iteration_bounds = array<i64: 2>, scalar_prefetch = 0 : i64, scratch_operands = 0 : i64, tpu.core_type = #tpu.core_type<tc>, window_params = [{transform_indices = @transform_0, window_bounds = array<i64: 1>}, {transform_indices = @transform_1, window_bounds = array<i64: 1, 4, 256>}, {transform_indices = @transform_2, window_bounds = array<i64: 1, 32, 256>}, {pipeline_mode = #tpu.pipeline_mode<synchronous>, transform_indices = @transform_3, window_bounds = array<i64: 1, 4>}, {pipeline_mode = #tpu.pipeline_mode<synchronous>, transform_indices = @transform_4, window_bounds = array<i64: 1, 32>}, {pipeline_mode = #tpu.pipeline_mode<synchronous>, transform_indices = @transform_5, window_bounds = array<i64: 2, 4>}, {pipeline_mode = #tpu.pipeline_mode<synchronous>, transform_indices = @transform_6, window_bounds = array<i64: 2, 32>}, {pipeline_mode = #tpu.pipeline_mode<synchronous>, transform_indices = @transform_7, window_bounds = array<i64: 2, 1>}, {pipeline_mode = #tpu.pipeline_mode<synchronous>, transform_indices = @transform_8, window_bounds = array<i64: 8, 2>}, {pipeline_mode = #tpu.pipeline_mode<synchronous>, transform_indices = @transform_9, window_bounds = array<i64: 8, 1>}, {pipeline_mode = #tpu.pipeline_mode<synchronous>, transform_indices = @transform_10, window_bounds = array<i64: 8, 4>}, {pipeline_mode = #tpu.pipeline_mode<synchronous>, transform_indices = @transform_11, window_bounds = array<i64: 8, 1>}, {transform_indices = @transform_12, window_bounds = array<i64: 1, 8, 256>}]} {
    %c0 = arith.constant 0 : index
    %c0_0 = arith.constant 0 : index
    %c0_1 = arith.constant 0 : index
    %0 = vector.load %arg2[%c0, %c0_0, %c0_1] : memref<1x4x256xf32, #tpu.memory_space<vmem>>, vector<1x4x256xf32>
    %1 = vector.shape_cast %0 : vector<1x4x256xf32> to vector<4x256xf32>
    %c0_2 = arith.constant 0 : index
    %c0_3 = arith.constant 0 : index
    %c0_4 = arith.constant 0 : index
    %2 = vector.load %arg3[%c0_2, %c0_3, %c0_4] : memref<1x32x256xf32, #tpu.memory_space<vmem>>, vector<1x32x256xf32>
    %3 = vector.shape_cast %2 : vector<1x32x256xf32> to vector<32x256xf32>
    %c0_5 = arith.constant 0 : index
    %c0_6 = arith.constant 0 : index
    %4 = vector.load %arg4[%c0_5, %c0_6] : memref<1x4xf32, #tpu.memory_space<vmem>>, vector<1x4xf32>
    %cst = arith.constant dense<0.000000e+00> : vector<1x256xf32>
    %5 = tpu.matmul %4, %1, %cst {dimension_numbers = #tpu.dot_dimension_numbers<[1], [0], [0], [1], [0, 0, 1, 1], [], []>} : vector<1x4xf32>, vector<4x256xf32>, vector<1x256xf32> -> vector<1x256xf32>
    %c0_7 = arith.constant 0 : index
    %c0_8 = arith.constant 0 : index
    %6 = vector.load %arg5[%c0_7, %c0_8] : memref<1x32xf32, #tpu.memory_space<vmem>>, vector<1x32xf32>
    %cst_9 = arith.constant dense<0.000000e+00> : vector<1x256xf32>
    %7 = tpu.matmul %6, %3, %cst_9 {dimension_numbers = #tpu.dot_dimension_numbers<[1], [0], [0], [1], [0, 0, 1, 1], [], []>} : vector<1x32xf32>, vector<32x256xf32>, vector<1x256xf32> -> vector<1x256xf32>
    %8 = arith.addf %5, %7 : vector<1x256xf32>
    %c0_10 = arith.constant 0 : index
    %9 = memref.load %arg1[%c0_10] : memref<1xf32, #tpu.memory_space<smem>>
    %10 = vector.broadcast %9 : f32 to vector<1x256xf32>
    %11 = arith.addf %8, %10 : vector<1x256xf32>
    %cst_11 = arith.constant 0.000000e+00 : f32
    %12 = vector.broadcast %cst_11 : f32 to vector<1x256xf32>
    %13 = arith.maximumf %11, %12 : vector<1x256xf32>
    %14 = arith.negf %13 : vector<1x256xf32>
    %15 = math.exp %14 : vector<1x256xf32>
    %cst_12 = arith.constant 1.000000e+00 : f32
    %16 = vector.broadcast %cst_12 : f32 to vector<1x256xf32>
    %17 = arith.addf %16, %15 : vector<1x256xf32>
    %18 = arith.divf %16, %17 : vector<1x256xf32>
    %19 = vector.broadcast %18 : vector<1x256xf32> to vector<4x256xf32>
    %20 = arith.mulf %1, %19 : vector<4x256xf32>
    %c0_13 = arith.constant 0 : index
    %c0_14 = arith.constant 0 : index
    %21 = vector.load %arg11[%c0_13, %c0_14] : memref<8x4xf32, #tpu.memory_space<vmem>>, vector<8x4xf32>
    %cst_15 = arith.constant dense<0.000000e+00> : vector<8x256xf32>
    %22 = tpu.matmul %21, %20, %cst_15 {dimension_numbers = #tpu.dot_dimension_numbers<[1], [0], [0], [1], [0, 0, 1, 1], [], []>} : vector<8x4xf32>, vector<4x256xf32>, vector<8x256xf32> -> vector<8x256xf32>
    %c0_16 = arith.constant 0 : index
    %c0_17 = arith.constant 0 : index
    %23 = vector.load %arg12[%c0_16, %c0_17] : memref<8x1xf32, #tpu.memory_space<vmem>>, vector<8x1xf32>
    %24 = vector.broadcast %23 : vector<8x1xf32> to vector<8x256xf32>
    %25 = arith.addf %22, %24 : vector<8x256xf32>
    %cst_18 = arith.constant dense<0.000000e+00> : vector<4xf32>
    %26 = vector.multi_reduction <add>, %1, %cst_18 [1] : vector<4x256xf32> to vector<4xf32>
    %27 = vector.shape_cast %26 : vector<4xf32> to vector<4x1xf32>
    %cst_19 = arith.constant 2.560000e+02 : f32
    %28 = vector.broadcast %cst_19 : f32 to vector<4x1xf32>
    %29 = arith.divf %27, %28 : vector<4x1xf32>
    %cst_20 = arith.constant dense<0xFF800000> : vector<4xf32>
    %30 = vector.multi_reduction <maximumf>, %1, %cst_20 [1] : vector<4x256xf32> to vector<4xf32>
    %31 = vector.shape_cast %30 : vector<4xf32> to vector<4x1xf32>
    %32 = arith.addf %29, %31 : vector<4x1xf32>
    %cst_21 = arith.constant dense<0.000000e+00> : vector<32xf32>
    %33 = vector.multi_reduction <add>, %3, %cst_21 [1] : vector<32x256xf32> to vector<32xf32>
    %34 = vector.shape_cast %33 : vector<32xf32> to vector<32x1xf32>
    %cst_22 = arith.constant 2.560000e+02 : f32
    %35 = vector.broadcast %cst_22 : f32 to vector<32x1xf32>
    %36 = arith.divf %34, %35 : vector<32x1xf32>
    %cst_23 = arith.constant dense<0xFF800000> : vector<32xf32>
    %37 = vector.multi_reduction <maximumf>, %3, %cst_23 [1] : vector<32x256xf32> to vector<32xf32>
    %38 = vector.shape_cast %37 : vector<32xf32> to vector<32x1xf32>
    %39 = arith.addf %36, %38 : vector<32x1xf32>
    %c0_24 = arith.constant 0 : index
    %c0_25 = arith.constant 0 : index
    %40 = vector.load %arg6[%c0_24, %c0_25] : memref<2x4xf32, #tpu.memory_space<vmem>>, vector<2x4xf32>
    %cst_26 = arith.constant dense<0.000000e+00> : vector<2x1xf32>
    %41 = tpu.matmul %40, %32, %cst_26 {dimension_numbers = #tpu.dot_dimension_numbers<[1], [0], [0], [1], [0, 0, 1, 1], [], []>} : vector<2x4xf32>, vector<4x1xf32>, vector<2x1xf32> -> vector<2x1xf32>
    %c0_27 = arith.constant 0 : index
    %c0_28 = arith.constant 0 : index
    %42 = vector.load %arg7[%c0_27, %c0_28] : memref<2x32xf32, #tpu.memory_space<vmem>>, vector<2x32xf32>
    %cst_29 = arith.constant dense<0.000000e+00> : vector<2x1xf32>
    %43 = tpu.matmul %42, %39, %cst_29 {dimension_numbers = #tpu.dot_dimension_numbers<[1], [0], [0], [1], [0, 0, 1, 1], [], []>} : vector<2x32xf32>, vector<32x1xf32>, vector<2x1xf32> -> vector<2x1xf32>
    %44 = arith.addf %41, %43 : vector<2x1xf32>
    %c0_30 = arith.constant 0 : index
    %c0_31 = arith.constant 0 : index
    %45 = vector.load %arg8[%c0_30, %c0_31] : memref<2x1xf32, #tpu.memory_space<vmem>>, vector<2x1xf32>
    %46 = arith.addf %44, %45 : vector<2x1xf32>
    %c0_32 = arith.constant 0 : index
    %c0_33 = arith.constant 0 : index
    %47 = vector.load %arg9[%c0_32, %c0_33] : memref<8x2xf32, #tpu.memory_space<vmem>>, vector<8x2xf32>
    %cst_34 = arith.constant dense<0.000000e+00> : vector<8x1xf32>
    %48 = tpu.matmul %47, %46, %cst_34 {dimension_numbers = #tpu.dot_dimension_numbers<[1], [0], [0], [1], [0, 0, 1, 1], [], []>} : vector<8x2xf32>, vector<2x1xf32>, vector<8x1xf32> -> vector<8x1xf32>
    %c0_35 = arith.constant 0 : index
    %c0_36 = arith.constant 0 : index
    %49 = vector.load %arg10[%c0_35, %c0_36] : memref<8x1xf32, #tpu.memory_space<vmem>>, vector<8x1xf32>
    %50 = arith.addf %48, %49 : vector<8x1xf32>
    %cst_37 = arith.constant 0.000000e+00 : f32
    %51 = vector.broadcast %cst_37 : f32 to vector<8x1xf32>
    %52 = arith.maximumf %50, %51 : vector<8x1xf32>
    %53 = arith.negf %52 : vector<8x1xf32>
    %54 = math.exp %53 : vector<8x1xf32>
    %cst_38 = arith.constant 1.000000e+00 : f32
    %55 = vector.broadcast %cst_38 : f32 to vector<8x1xf32>
    %56 = arith.addf %55, %54 : vector<8x1xf32>
    %57 = arith.divf %55, %56 : vector<8x1xf32>
    %58 = vector.broadcast %57 : vector<8x1xf32> to vector<8x256xf32>
    %59 = arith.mulf %25, %58 : vector<8x256xf32>
    %c0_39 = arith.constant 0 : index
    %c0_40 = arith.constant 0 : index
    %c0_41 = arith.constant 0 : index
    %60 = vector.load %arg13[%c0_39, %c0_40, %c0_41] : memref<1x8x256xf32, #tpu.memory_space<vmem>>, vector<1x8x256xf32>
    %61 = vector.shape_cast %60 : vector<1x8x256xf32> to vector<8x256xf32>
    %62 = vector.shape_cast %59 : vector<8x256xf32> to vector<1x8x256xf32>
    tpu.vector_store %arg13[%c0_39, %c0_40, %c0_41], %62 {strides = array<i32>} : memref<1x8x256xf32, #tpu.memory_space<vmem>>, vector<1x8x256xf32>,
    return
  }
  func.func @transform_0(%arg0: i32) -> i32 {
    %c0_i32 = arith.constant 0 : i32
    %c0_i32_0 = arith.constant 0 : i32
    return %c0_i32 : i32
  }
  func.func @transform_1(%arg0: i32) -> (i32, i32, i32) {
    %c0_i32 = arith.constant 0 : i32
    %c0_i32_0 = arith.constant 0 : i32
    %c0_i32_1 = arith.constant 0 : i32
    return %arg0, %c0_i32, %c0_i32_0 : i32, i32, i32
  }
  func.func @transform_2(%arg0: i32) -> (i32, i32, i32) {
    %c0_i32 = arith.constant 0 : i32
    %c0_i32_0 = arith.constant 0 : i32
    %c0_i32_1 = arith.constant 0 : i32
    return %arg0, %c0_i32, %c0_i32_0 : i32, i32, i32
  }
  func.func @transform_3(%arg0: i32) -> (i32, i32) {
    %c0_i32 = arith.constant 0 : i32
    %c0_i32_0 = arith.constant 0 : i32
    %c0_i32_1 = arith.constant 0 : i32
    return %c0_i32, %c0_i32_0 : i32, i32
  }
  func.func @transform_4(%arg0: i32) -> (i32, i32) {
    %c0_i32 = arith.constant 0 : i32
    %c0_i32_0 = arith.constant 0 : i32
    %c0_i32_1 = arith.constant 0 : i32
    return %c0_i32, %c0_i32_0 : i32, i32
  }
  func.func @transform_5(%arg0: i32) -> (i32, i32) {
    %c0_i32 = arith.constant 0 : i32
    %c0_i32_0 = arith.constant 0 : i32
    %c0_i32_1 = arith.constant 0 : i32
    return %c0_i32, %c0_i32_0 : i32, i32
  }
  func.func @transform_6(%arg0: i32) -> (i32, i32) {
    %c0_i32 = arith.constant 0 : i32
    %c0_i32_0 = arith.constant 0 : i32
    %c0_i32_1 = arith.constant 0 : i32
    return %c0_i32, %c0_i32_0 : i32, i32
  }
  func.func @transform_7(%arg0: i32) -> (i32, i32) {
    %c0_i32 = arith.constant 0 : i32
    %c0_i32_0 = arith.constant 0 : i32
    %c0_i32_1 = arith.constant 0 : i32
    return %c0_i32, %c0_i32_0 : i32, i32
  }
  func.func @transform_8(%arg0: i32) -> (i32, i32) {
    %c0_i32 = arith.constant 0 : i32
    %c0_i32_0 = arith.constant 0 : i32
    %c0_i32_1 = arith.constant 0 : i32
    return %c0_i32, %c0_i32_0 : i32, i32
  }
  func.func @transform_9(%arg0: i32) -> (i32, i32) {
    %c0_i32 = arith.constant 0 : i32
    %c0_i32_0 = arith.constant 0 : i32
    %c0_i32_1 = arith.constant 0 : i32
    return %c0_i32, %c0_i32_0 : i32, i32
  }
  func.func @transform_10(%arg0: i32) -> (i32, i32) {
    %c0_i32 = arith.constant 0 : i32
    %c0_i32_0 = arith.constant 0 : i32
    %c0_i32_1 = arith.constant 0 : i32
    return %c0_i32, %c0_i32_0 : i32, i32
  }
  func.func @transform_11(%arg0: i32) -> (i32, i32) {
    %c0_i32 = arith.constant 0 : i32
    %c0_i32_0 = arith.constant 0 : i32
    %c0_i32_1 = arith.constant 0 : i32
    return %c0_i32, %c0_i32_0 : i32, i32
  }
  func.func @transform_12(%arg0: i32) -> (i32, i32, i32) {
    %c0_i32 = arith.constant 0 : i32
    %c0_i32_0 = arith.constant 0 : i32
    %c0_i32_1 = arith.constant 0 : i32
    return %arg0, %c0_i32, %c0_i32_0 : i32, i32, i32
  }
}

</mosaic_0001>

<llo_original>
// kernel: tpu_custom_call.1
$region0: #{tpu_custom_call.1}
  #allocation0 [shape = 'u32[]', space=smem, size = 0x4, offset = 0x4, fixed_abs, tag = 'smem constant byte address 0x4 - core index']
  #allocation1 [shape = 'u32[144,128]{1,0:T(1,128)}', space=vmem, size = 0x12000, scoped, tag = 'internal scratch']
  #allocation2 [shape = 'f32[1]{0:T(128)S(6)}', space=smem, size = 0x200, scoped, tag = 'scoped memory for tpu_custom_call.1']
  %s0 = inlined_call_operand.<no memory space> [shape: f32[1], index: 0, kind: input, shape index: {}]
  %s1 = inlined_call_operand.vmem [shape: f32[2,4,256], index: 1, kind: input, shape index: {}]
  %s2 = inlined_call_operand.hbm [shape: f32[2,32,256], index: 2, kind: input, shape index: {}]
  %s3 = inlined_call_operand.vmem [shape: f32[1,4], index: 3, kind: input, shape index: {}]
  %s4 = inlined_call_operand.vmem [shape: f32[1,32], index: 4, kind: input, shape index: {}]
  %s5 = inlined_call_operand.vmem [shape: f32[2,4], index: 5, kind: input, shape index: {}]
  %s6 = inlined_call_operand.vmem [shape: f32[2,32], index: 6, kind: input, shape index: {}]
  %s7 = inlined_call_operand.vmem [shape: f32[2,1], index: 7, kind: input, shape index: {}]
  %s8 = inlined_call_operand.vmem [shape: f32[8,2], index: 8, kind: input, shape index: {}]
  %s9 = inlined_call_operand.vmem [shape: f32[8,1], index: 9, kind: input, shape index: {}]
  %s10 = inlined_call_operand.vmem [shape: f32[8,4], index: 10, kind: input, shape index: {}]
  %s11 = inlined_call_operand.vmem [shape: f32[8,1], index: 11, kind: input, shape index: {}]
  %s12 = inlined_call_operand.hbm [shape: f32[2,8,256], index: 12, kind: output, shape index: {}]
  %s13 = sld [smem:[#allocation0]]
  $region85: #{tpu_custom_call.1} parent=0
    _
  %s15 = ssub.s32 1, %s13
  %s16 = scalar_select 0, %s15, %s13
  %17 = sst [smem:[#allocation2]] %s0
  $region1: #{tpu_custom_call.1} parent=0
    #allocation3 [shape = 'u8[65536]{0}', space=vmem, size = 0x10000, scoped, tag = 'input window, operand 2']
    #allocation4 [shape = 's32[2]{0}', space=sflag, size = 0x8, scoped, tag = 'scoped memory for tpu_custom_call.1']
    #allocation5 [shape = 's32[2]{0}', space=sflag, size = 0x8, scoped, tag = 'scoped memory for tpu_custom_call.1']
    #allocation6 [shape = 'u8[16384]{0}', space=vmem, size = 0x4000, scoped, tag = 'output window, operand 0']
    %18 = vsyncpa [#allocation4], 0
    %s19 = scalar_lea.sflag [#allocation4], 1
    %20 = vsyncpa %s19, 0
    %21 = vsyncpa [#allocation5], 0
    %s22 = scalar_lea.sflag [#allocation5], 1
    %23 = vsyncpa %s22, 0
    loop: start=0, step=1, limit=4
    $region2: #{tpu_custom_call.1} parent=1 // loop_pre_header
      _
    $region3: #{tpu_custom_call.1} parent=1 // loop_header
      %s25 = sphi 0, %s29
      %p26 = scmp.ge.s32.totalorder %s25, 4
      %s33 = sphi 0, %s33
      %s35 = sphi 0, %s33
      %s36 = sphi 0, %s35
      %s50 = sphi 0, %s36
      %s56 = sphi 0, %s58
      %s59 = sphi 0, %s56
      %s60 = sphi 0, %s59
      %s76 = sphi 0, %s60
      %s82 = sphi 0, %s84
      %s85 = sphi 0, %s82
      %s86 = sphi 0, %s85
      %s102 = sphi 0, %s86
      %s106 = sphi 0, %s106
      %s108 = sphi 0, %s106
      %s109 = sphi 0, %s108
      %s123 = sphi 0, %s109
      %s127 = sphi 0, %s127
      %s129 = sphi 0, %s127
      %s130 = sphi 0, %s129
      %s144 = sphi 0, %s130
      %s148 = sphi 0, %s148
      %s150 = sphi 0, %s148
      %s151 = sphi 0, %s150
      %s165 = sphi 0, %s151
      %s169 = sphi 0, %s169
      %s171 = sphi 0, %s169
      %s172 = sphi 0, %s171
      %s186 = sphi 0, %s172
      %s190 = sphi 0, %s190
      %s192 = sphi 0, %s190
      %s193 = sphi 0, %s192
      %s207 = sphi 0, %s193
      %s211 = sphi 0, %s211
      %s213 = sphi 0, %s211
      %s214 = sphi 0, %s213
      %s228 = sphi 0, %s214
      %s232 = sphi 0, %s232
      %s234 = sphi 0, %s232
      %s235 = sphi 0, %s234
      %s249 = sphi 0, %s235
      %s253 = sphi 0, %s253
      %s255 = sphi 0, %s253
      %s256 = sphi 0, %s255
      %s270 = sphi 0, %s256
      %s274 = sphi 0, %s274
      %s276 = sphi 0, %s274
      %s277 = sphi 0, %s276
      %s291 = sphi 0, %s277
      %s297 = sphi 0, %s299
      %s300 = sphi 0, %s297
      %s301 = sphi 0, %s300
      %s317 = sphi 0, %s301
    $region4: #{tpu_custom_call.1} parent=1 // loop_header_branch
      %28 = sbr.rel (%p26) target = $region8
    $region5: #{tpu_custom_call.1} parent=1 // loop_body
      %s30 = ssub.s32 %s25, 1
      %s31 = ssub.s32 %s25, 2
      %s32 = sadd.s32 %s25, 1
      %s34 = sadd.s32 %s33, 1
      %p37 = scmp.eq.s32.totalorder %s25, 1
      %p38 = scmp.ne.s32.totalorder %s33, %s35
      %p39 = scmp.eq.s32.totalorder %s25, 0
      %p40 = por %p38, %p39
      %p41 = scmp.ne.s32.totalorder %s33, %s35
      %p42 = scmp.eq.s32.totalorder %s30, 1
      %p43 = por %p41, %p42
      %p44 = scmp.ne.s32.totalorder %s35, %s36
      %p45 = scmp.eq.s32.totalorder %s30, 0
      %p46 = por %p44, %p45
      %p47 = scmp.ne.s32.totalorder %s35, %s36
      %p48 = scmp.eq.s32.totalorder %s31, 1
      %p49 = por %p47, %p48
      %p51 = scmp.ne.s32.totalorder %s36, %s50
      %p52 = scmp.eq.s32.totalorder %s31, 0
      %p53 = por %p51, %p52
      %s54 = ssub.s32 %s25, %s32
      %p55 = scmp.eq.s32.totalorder %s54, 0
      %s57 = sadd.s32 %s56, 1
      %s58 = scalar_select %p55, %s56, %s57
      %p61 = pneg %p55
      %p62 = scmp.eq.s32.totalorder %s25, 1
      %p63 = por %p61, %p62
      %p64 = scmp.ne.s32.totalorder %s56, %s59
      %p65 = scmp.eq.s32.totalorder %s25, 0
      %p66 = por %p64, %p65
      %p67 = scmp.ne.s32.totalorder %s56, %s59
      %p68 = scmp.eq.s32.totalorder %s30, 1
      %p69 = por %p67, %p68
      %p70 = scmp.ne.s32.totalorder %s59, %s60
      %p71 = scmp.eq.s32.totalorder %s30, 0
      %p72 = por %p70, %p71
      %p73 = scmp.ne.s32.totalorder %s59, %s60
      %p74 = scmp.eq.s32.totalorder %s31, 1
      %p75 = por %p73, %p74
      %p77 = scmp.ne.s32.totalorder %s60, %s76
      %p78 = scmp.eq.s32.totalorder %s31, 0
      %p79 = por %p77, %p78
      %s80 = ssub.s32 %s25, %s32
      %p81 = scmp.eq.s32.totalorder %s80, 0
      %s83 = sadd.s32 %s82, 1
      %s84 = scalar_select %p81, %s82, %s83
      %p87 = pneg %p81
      %p88 = scmp.eq.s32.totalorder %s25, 1
      %p89 = por %p87, %p88
      %p90 = scmp.ne.s32.totalorder %s82, %s85
      %p91 = scmp.eq.s32.totalorder %s25, 0
      %p92 = por %p90, %p91
      %p93 = scmp.ne.s32.totalorder %s82, %s85
      %p94 = scmp.eq.s32.totalorder %s30, 1
      %p95 = por %p93, %p94
      %p96 = scmp.ne.s32.totalorder %s85, %s86
      %p97 = scmp.eq.s32.totalorder %s30, 0
      %p98 = por %p96, %p97
      %p99 = scmp.ne.s32.totalorder %s85, %s86
      %p100 = scmp.eq.s32.totalorder %s31, 1
      %p101 = por %p99, %p100
      %p103 = scmp.ne.s32.totalorder %s86, %s102
      %p104 = scmp.eq.s32.totalorder %s31, 0
      %p105 = por %p103, %p104
      %s107 = sadd.s32 %s106, 1
      %p110 = scmp.eq.s32.totalorder %s25, 1
      %p111 = scmp.ne.s32.totalorder %s106, %s108
      %p112 = scmp.eq.s32.totalorder %s25, 0
      %p113 = por %p111, %p112
      %p114 = scmp.ne.s32.totalorder %s106, %s108
      %p115 = scmp.eq.s32.totalorder %s30, 1
      %p116 = por %p114, %p115
      %p117 = scmp.ne.s32.totalorder %s108, %s109
      %p118 = scmp.eq.s32.totalorder %s30, 0
      %p119 = por %p117, %p118
      %p120 = scmp.ne.s32.totalorder %s108, %s109
      %p121 = scmp.eq.s32.totalorder %s31, 1
      %p122 = por %p120, %p121
      %p124 = scmp.ne.s32.totalorder %s109, %s123
      %p125 = scmp.eq.s32.totalorder %s31, 0
      %p126 = por %p124, %p125
      %s128 = sadd.s32 %s127, 1
      %p131 = scmp.eq.s32.totalorder %s25, 1
      %p132 = scmp.ne.s32.totalorder %s127, %s129
      %p133 = scmp.eq.s32.totalorder %s25, 0
      %p134 = por %p132, %p133
      %p135 = scmp.ne.s32.totalorder %s127, %s129
      %p136 = scmp.eq.s32.totalorder %s30, 1
      %p137 = por %p135, %p136
      %p138 = scmp.ne.s32.totalorder %s129, %s130
      %p139 = scmp.eq.s32.totalorder %s30, 0
      %p140 = por %p138, %p139
      %p141 = scmp.ne.s32.totalorder %s129, %s130
      %p142 = scmp.eq.s32.totalorder %s31, 1
      %p143 = por %p141, %p142
      %p145 = scmp.ne.s32.totalorder %s130, %s144
      %p146 = scmp.eq.s32.totalorder %s31, 0
      %p147 = por %p145, %p146
      %s149 = sadd.s32 %s148, 1
      %p152 = scmp.eq.s32.totalorder %s25, 1
      %p153 = scmp.ne.s32.totalorder %s148, %s150
      %p154 = scmp.eq.s32.totalorder %s25, 0
      %p155 = por %p153, %p154
      %p156 = scmp.ne.s32.totalorder %s148, %s150
      %p157 = scmp.eq.s32.totalorder %s30, 1
      %p158 = por %p156, %p157
      %p159 = scmp.ne.s32.totalorder %s150, %s151
      %p160 = scmp.eq.s32.totalorder %s30, 0
      %p161 = por %p159, %p160
      %p162 = scmp.ne.s32.totalorder %s150, %s151
      %p163 = scmp.eq.s32.totalorder %s31, 1
      %p164 = por %p162, %p163
      %p166 = scmp.ne.s32.totalorder %s151, %s165
      %p167 = scmp.eq.s32.totalorder %s31, 0
      %p168 = por %p166, %p167
      %s170 = sadd.s32 %s169, 1
      %p173 = scmp.eq.s32.totalorder %s25, 1
      %p174 = scmp.ne.s32.totalorder %s169, %s171
      %p175 = scmp.eq.s32.totalorder %s25, 0
      %p176 = por %p174, %p175
      %p177 = scmp.ne.s32.totalorder %s169, %s171
      %p178 = scmp.eq.s32.totalorder %s30, 1
      %p179 = por %p177, %p178
      %p180 = scmp.ne.s32.totalorder %s171, %s172
      %p181 = scmp.eq.s32.totalorder %s30, 0
      %p182 = por %p180, %p181
      %p183 = scmp.ne.s32.totalorder %s171, %s172
      %p184 = scmp.eq.s32.totalorder %s31, 1
      %p185 = por %p183, %p184
      %p187 = scmp.ne.s32.totalorder %s172, %s186
      %p188 = scmp.eq.s32.totalorder %s31, 0
      %p189 = por %p187, %p188
      %s191 = sadd.s32 %s190, 1
      %p194 = scmp.eq.s32.totalorder %s25, 1
      %p195 = scmp.ne.s32.totalorder %s190, %s192
      %p196 = scmp.eq.s32.totalorder %s25, 0
      %p197 = por %p195, %p196
      %p198 = scmp.ne.s32.totalorder %s190, %s192
      %p199 = scmp.eq.s32.totalorder %s30, 1
      %p200 = por %p198, %p199
      %p201 = scmp.ne.s32.totalorder %s192, %s193
      %p202 = scmp.eq.s32.totalorder %s30, 0
      %p203 = por %p201, %p202
      %p204 = scmp.ne.s32.totalorder %s192, %s193
      %p205 = scmp.eq.s32.totalorder %s31, 1
      %p206 = por %p204, %p205
      %p208 = scmp.ne.s32.totalorder %s193, %s207
      %p209 = scmp.eq.s32.totalorder %s31, 0
      %p210 = por %p208, %p209
      %s212 = sadd.s32 %s211, 1
      %p215 = scmp.eq.s32.totalorder %s25, 1
      %p216 = scmp.ne.s32.totalorder %s211, %s213
      %p217 = scmp.eq.s32.totalorder %s25, 0
      %p218 = por %p216, %p217
      %p219 = scmp.ne.s32.totalorder %s211, %s213
      %p220 = scmp.eq.s32.totalorder %s30, 1
      %p221 = por %p219, %p220
      %p222 = scmp.ne.s32.totalorder %s213, %s214
      %p223 = scmp.eq.s32.totalorder %s30, 0
      %p224 = por %p222, %p223
      %p225 = scmp.ne.s32.totalorder %s213, %s214
      %p226 = scmp.eq.s32.totalorder %s31, 1
      %p227 = por %p225, %p226
      %p229 = scmp.ne.s32.totalorder %s214, %s228
      %p230 = scmp.eq.s32.totalorder %s31, 0
      %p231 = por %p229, %p230
      %s233 = sadd.s32 %s232, 1
      %p236 = scmp.eq.s32.totalorder %s25, 1
      %p237 = scmp.ne.s32.totalorder %s232, %s234
      %p238 = scmp.eq.s32.totalorder %s25, 0
      %p239 = por %p237, %p238
      %p240 = scmp.ne.s32.totalorder %s232, %s234
      %p241 = scmp.eq.s32.totalorder %s30, 1
      %p242 = por %p240, %p241
      %p243 = scmp.ne.s32.totalorder %s234, %s235
      %p244 = scmp.eq.s32.totalorder %s30, 0
      %p245 = por %p243, %p244
      %p246 = scmp.ne.s32.totalorder %s234, %s235
      %p247 = scmp.eq.s32.totalorder %s31, 1
      %p248 = por %p246, %p247
      %p250 = scmp.ne.s32.totalorder %s235, %s249
      %p251 = scmp.eq.s32.totalorder %s31, 0
      %p252 = por %p250, %p251
      %s254 = sadd.s32 %s253, 1
      %p257 = scmp.eq.s32.totalorder %s25, 1
      %p258 = scmp.ne.s32.totalorder %s253, %s255
      %p259 = scmp.eq.s32.totalorder %s25, 0
      %p260 = por %p258, %p259
      %p261 = scmp.ne.s32.totalorder %s253, %s255
      %p262 = scmp.eq.s32.totalorder %s30, 1
      %p263 = por %p261, %p262
      %p264 = scmp.ne.s32.totalorder %s255, %s256
      %p265 = scmp.eq.s32.totalorder %s30, 0
      %p266 = por %p264, %p265
      %p267 = scmp.ne.s32.totalorder %s255, %s256
      %p268 = scmp.eq.s32.totalorder %s31, 1
      %p269 = por %p267, %p268
      %p271 = scmp.ne.s32.totalorder %s256, %s270
      %p272 = scmp.eq.s32.totalorder %s31, 0
      %p273 = por %p271, %p272
      %s275 = sadd.s32 %s274, 1
      %p278 = scmp.eq.s32.totalorder %s25, 1
      %p279 = scmp.ne.s32.totalorder %s274, %s276
      %p280 = scmp.eq.s32.totalorder %s25, 0
      %p281 = por %p279, %p280
      %p282 = scmp.ne.s32.totalorder %s274, %s276
      %p283 = scmp.eq.s32.totalorder %s30, 1
      %p284 = por %p282, %p283
      %p285 = scmp.ne.s32.totalorder %s276, %s277
      %p286 = scmp.eq.s32.totalorder %s30, 0
      %p287 = por %p285, %p286
      %p288 = scmp.ne.s32.totalorder %s276, %s277
      %p289 = scmp.eq.s32.totalorder %s31, 1
      %p290 = por %p288, %p289
      %p292 = scmp.ne.s32.totalorder %s277, %s291
      %p293 = scmp.eq.s32.totalorder %s31, 0
      %p294 = por %p292, %p293
      %s295 = ssub.s32 %s25, %s32
      %p296 = scmp.eq.s32.totalorder %s295, 0
      %s298 = sadd.s32 %s297, 1
      %s299 = scalar_select %p296, %s297, %s298
      %p302 = pneg %p296
      %p303 = scmp.eq.s32.totalorder %s25, 1
      %p304 = por %p302, %p303
      %p305 = scmp.ne.s32.totalorder %s297, %s300
      %p306 = scmp.eq.s32.totalorder %s25, 0
      %p307 = por %p305, %p306
      %p308 = scmp.ne.s32.totalorder %s297, %s300
      %p309 = scmp.eq.s32.totalorder %s30, 1
      %p310 = por %p308, %p309
      %p311 = scmp.ne.s32.totalorder %s300, %s301
      %p312 = scmp.eq.s32.totalorder %s30, 0
      %p313 = por %p311, %p312
      %p314 = scmp.ne.s32.totalorder %s300, %s301
      %p315 = scmp.eq.s32.totalorder %s31, 1
      %p316 = por %p314, %p315
      %p318 = scmp.ne.s32.totalorder %s301, %s317
      %p319 = scmp.eq.s32.totalorder %s31, 0
      %p320 = por %p318, %p319
      %p321 = scmp.le.s32.totalorder 1, %s25
      %p322 = scmp.lt.s32.totalorder %s25, 3
      %p323 = pnand %p321, %p322
      %p324 = pneg %p323
      // Predicated region
      $region9: #{tpu_custom_call.1} parent=5 // pred_check
        _
      $region10: #{tpu_custom_call.1} parent=5 // pred_check_branch
        %326 = sbr.rel (%p323) target = $region12
      $region11: #{tpu_custom_call.1} parent=5 // pred_region
        %s327 = ssub.s32 %s25, 1
        // Predicated region
        $region13: #{tpu_custom_call.1} parent=11 // pred_check
          %p328 = pneg %p46
        $region14: #{tpu_custom_call.1} parent=11 // pred_check_branch
          %330 = sbr.rel (%p328) target = $region16
        $region15: #{tpu_custom_call.1} parent=11 // pred_region
          _
        $region16: #{tpu_custom_call.1} parent=11 // pred_fallthru
          _
        // Predicated region
        $region17: #{tpu_custom_call.1} parent=11 // pred_check
          %p331 = pneg %p119
        $region18: #{tpu_custom_call.1} parent=11 // pred_check_branch
          %333 = sbr.rel (%p331) target = $region20
        $region19: #{tpu_custom_call.1} parent=11 // pred_region
          _
        $region20: #{tpu_custom_call.1} parent=11 // pred_fallthru
          _
        // Predicated region
        $region21: #{tpu_custom_call.1} parent=11 // pred_check
          %p334 = pneg %p140
        $region22: #{tpu_custom_call.1} parent=11 // pred_check_branch
          %336 = sbr.rel (%p334) target = $region24
        $region23: #{tpu_custom_call.1} parent=11 // pred_region
          _
        $region24: #{tpu_custom_call.1} parent=11 // pred_fallthru
          _
        // Predicated region
        $region25: #{tpu_custom_call.1} parent=11 // pred_check
          %p337 = pneg %p161
        $region26: #{tpu_custom_call.1} parent=11 // pred_check_branch
          %339 = sbr.rel (%p337) target = $region28
        $region27: #{tpu_custom_call.1} parent=11 // pred_region
          _
        $region28: #{tpu_custom_call.1} parent=11 // pred_fallthru
          _
        // Predicated region
        $region29: #{tpu_custom_call.1} parent=11 // pred_check
          %p340 = pneg %p182
        $region30: #{tpu_custom_call.1} parent=11 // pred_check_branch
          %342 = sbr.rel (%p340) target = $region32
        $region31: #{tpu_custom_call.1} parent=11 // pred_region
          _
        $region32: #{tpu_custom_call.1} parent=11 // pred_fallthru
          _
        // Predicated region
        $region33: #{tpu_custom_call.1} parent=11 // pred_check
          %p343 = pneg %p203
        $region34: #{tpu_custom_call.1} parent=11 // pred_check_branch
          %345 = sbr.rel (%p343) target = $region36
        $region35: #{tpu_custom_call.1} parent=11 // pred_region
          _
        $region36: #{tpu_custom_call.1} parent=11 // pred_fallthru
          _
        // Predicated region
        $region37: #{tpu_custom_call.1} parent=11 // pred_check
          %p346 = pneg %p224
        $region38: #{tpu_custom_call.1} parent=11 // pred_check_branch
          %348 = sbr.rel (%p346) target = $region40
        $region39: #{tpu_custom_call.1} parent=11 // pred_region
          _
        $region40: #{tpu_custom_call.1} parent=11 // pred_fallthru
          _
        // Predicated region
        $region41: #{tpu_custom_call.1} parent=11 // pred_check
          %p349 = pneg %p245
        $region42: #{tpu_custom_call.1} parent=11 // pred_check_branch
          %351 = sbr.rel (%p349) target = $region44
        $region43: #{tpu_custom_call.1} parent=11 // pred_region
          _
        $region44: #{tpu_custom_call.1} parent=11 // pred_fallthru
          _
        // Predicated region
        $region45: #{tpu_custom_call.1} parent=11 // pred_check
          %p352 = pneg %p266
        $region46: #{tpu_custom_call.1} parent=11 // pred_check_branch
          %354 = sbr.rel (%p352) target = $region48
        $region47: #{tpu_custom_call.1} parent=11 // pred_region
          _
        $region48: #{tpu_custom_call.1} parent=11 // pred_fallthru
          _
        // Predicated region
        $region49: #{tpu_custom_call.1} parent=11 // pred_check
          %p355 = pneg %p287
        $region50: #{tpu_custom_call.1} parent=11 // pred_check_branch
          %357 = sbr.rel (%p355) target = $region52
        $region51: #{tpu_custom_call.1} parent=11 // pred_region
          _
        $region52: #{tpu_custom_call.1} parent=11 // pred_fallthru
          _
      $region12: #{tpu_custom_call.1} parent=5 // pred_fallthru
        _
      %p358 = scmp.lt.s32.totalorder %s25, 2
      // Predicated region
      $region53: #{tpu_custom_call.1} parent=5 // pred_check
        %p359 = pneg %p358
      $region54: #{tpu_custom_call.1} parent=5 // pred_check_branch
        %361 = sbr.rel (%p359) target = $region56
      $region55: #{tpu_custom_call.1} parent=5 // pred_region
        // Predicated region
        $region57: #{tpu_custom_call.1} parent=55 // pred_check
          %p362 = pneg %p66
        $region58: #{tpu_custom_call.1} parent=55 // pred_check_branch
          %364 = sbr.rel (%p362) target = $region60
        $region59: #{tpu_custom_call.1} parent=55 // pred_region
          %p365 = scmp.lt.s32.totalorder %s25, 1
          %s366 = scalar_select %p365, %s25, 1
          %s367 = smul.addr %s366, 2
          %s368 = smul.addr %s367, 4
          %s369 = scalar_lea.vmem %s1, %s368
        $region60: #{tpu_custom_call.1} parent=55 // pred_fallthru
          _
        // Predicated region
        $region61: #{tpu_custom_call.1} parent=55 // pred_check
          %p370 = pneg %p92
        $region62: #{tpu_custom_call.1} parent=55 // pred_check_branch
          %372 = sbr.rel (%p370) target = $region64
        $region63: #{tpu_custom_call.1} parent=55 // pred_region
          %s373 = sand.u32 %s82, 1
          %s374 = scalar_lea.sflag [#allocation4], %s373
          %s375 = sand.u32 %s82, 1
          %s376 = smul.addr %s375, 64
          %s377 = scalar_lea.vmem [#allocation3], %s376
          %s379 = ssub.s32 1024, 1024
          %380 = vsyncadd %s374, %s379
          %s381 = smul.addr %s25, 8
          %s382 = smul.addr %s381, 128
          %s383 = scalar_lea.hbm %s2, %s382
          %s384 = sshll.u32 %s377, 4
          %s385 = int_to_ptr.vmem [resolvable:$true] %s384
          %390 = dma.hbm_to_vmem [thread:$0]  %s383, 1024, %s385, %s374, 256, 256, 16
        $region64: #{tpu_custom_call.1} parent=55 // pred_fallthru
          _
      $region56: #{tpu_custom_call.1} parent=5 // pred_fallthru
        _
      %p391 = scmp.le.s32.totalorder 1, %s25
      %p392 = scmp.lt.s32.totalorder %s25, 3
      %p393 = pnand %p391, %p392
      %p394 = pneg %p393
      // Predicated region
      $region65: #{tpu_custom_call.1} parent=5 // pred_check
        _
      $region66: #{tpu_custom_call.1} parent=5 // pred_check_branch
        %396 = sbr.rel (%p393) target = $region68
      $region67: #{tpu_custom_call.1} parent=5 // pred_region
        %s397 = ssub.s32 %s25, 1
        %s398 = sand.u32 %s85, 1
        %s399 = scalar_lea.sflag [#allocation4], %s398
        %s400 = sand.u32 %s85, 1
        %s401 = smul.addr %s400, 64
        %s402 = scalar_lea.vmem [#allocation3], %s401
        // Predicated region
        $region69: #{tpu_custom_call.1} parent=67 // pred_check
          %p403 = pneg %p98
        $region70: #{tpu_custom_call.1} parent=67 // pred_check_branch
          %405 = sbr.rel (%p403) target = $region72
        $region71: #{tpu_custom_call.1} parent=67 // pred_region
          %406 = dma.done %s399, 1024
        $region72: #{tpu_custom_call.1} parent=67 // pred_fallthru
          _
        %p407 = pneg %p46
        %p408 = pneg %p43
        %p409 = scmp.lt.s32.totalorder %s30, 1
        %s410 = scalar_select %p409, %s30, 1
        %s411 = smul.addr %s410, 2
        %s412 = smul.addr %s411, 4
        %s413 = scalar_lea.vmem %s1, %s412
        %p414 = pneg %p72
        %p415 = pneg %p69
        %s416 = sand.u32 %s85, 1
        %s417 = scalar_lea.sflag [#allocation4], %s416
        %s418 = sand.u32 %s85, 1
        %s419 = smul.addr %s418, 64
        %s420 = scalar_lea.vmem [#allocation3], %s419
        %p421 = pneg %p98
        %p422 = pneg %p95
        %p423 = pneg %p119
        %p424 = pneg %p116
        %p425 = pneg %p140
        %p426 = pneg %p137
        %p427 = pneg %p161
        %p428 = pneg %p158
        %p429 = pneg %p182
        %p430 = pneg %p179
        %p431 = pneg %p203
        %p432 = pneg %p200
        %p433 = pneg %p224
        %p434 = pneg %p221
        %p435 = pneg %p245
        %p436 = pneg %p242
        %p437 = pneg %p266
        %p438 = pneg %p263
        %p439 = pneg %p287
        %p440 = pneg %p284
        %p441 = pneg %p313
        %p442 = pneg %p310
        %s443 = sand.u32 %s300, 1
        %s444 = scalar_lea.sflag [#allocation5], %s443
        %s445 = sand.u32 %s300, 1
        %s446 = smul.addr %s445, 16
        %s447 = scalar_lea.vmem [#allocation6], %s446
        %p448 = scmp.lt.s32.totalorder %s30, 1
        %s449 = scalar_select %p448, %s30, 1
        %s450 = smul.addr %s449, 2
        %s451 = smul.addr %s450, 4
        %s452 = scalar_lea.vmem %s1, %s451
        %v453 = vld [vmem:[%s452] sm:$0xff]
        %v454 = vld [vmem:[%s402] sm:$0xff]
        %v455 = vld [vmem:[%s402 + $0x8] sm:$0xff]
        %v456 = vld [vmem:[%s402 + $0x10] sm:$0xff]
        %v457 = vld [vmem:[%s402 + $0x18] sm:$0xff]
        %v458 = vld [vmem:[%s402 + $0x20] sm:$0xff]
        %v459 = vld [vmem:[%s402 + $0x28] sm:$0xff]
        %v460 = vld [vmem:[%s402 + $0x30] sm:$0xff]
        %v461 = vld [vmem:[%s402 + $0x38] sm:$0xff]
        %v462 = vld [vmem:[%s3] sm:$0x1]
        %v463 = vld [vmem:[%s4] sm:$0x1]
        %vm464 = vcmask 261120
        %v466 = vsel %vm464, %v463, 0
        %468 = vmatprep.subr.mxu0 %v455
        %469 = vmatpush1.msra.mxu0 %v454
        %470 = vmatprep.subr.mxu0 %v457
        %471 = vmatpush1.msra.mxu0 %v456
        %472 = vmatprep.subr.mxu0 %v459
        %473 = vmatpush1.msra.mxu0 %v458
        %474 = vmatprep.subr.mxu0 %v461
        %475 = vmatpush1.msra.mxu0 %v460
        %476 = vmatprep.subr.mxu0 0.0
        %477 = vmatpush1.msra.mxu0 0.0
        %478 = vmatprep.subr.mxu0 0.0
        %479 = vmatpush1.msra.mxu0 0.0
        %480 = vmatprep.subr.mxu0 0.0
        %481 = vmatpush1.msra.mxu0 0.0
        %482 = vmatprep.subr.mxu0 0.0
        %483 = vmatpush1.msra.mxu0 0.0
        %484 = vmatprep.subr.mxu0 0.0
        %485 = vmatpush1.msra.mxu0 0.0
        %486 = vmatprep.subr.mxu0 0.0
        %487 = vmatpush1.msra.mxu0 0.0
        %488 = vmatprep.subr.mxu0 0.0
        %489 = vmatpush1.msra.mxu0 0.0
        %490 = vmatprep.subr.mxu0 0.0
        %491 = vmatpush1.msra.mxu0 0.0
        %492 = vmatprep.subr.mxu0 0.0
        %493 = vmatpush1.msra.mxu0 0.0
        %494 = vmatprep.subr.mxu0 0.0
        %495 = vmatpush1.msra.mxu0 0.0
        %496 = vmatprep.subr.mxu0 0.0
        %497 = vmatpush1.msra.mxu0 0.0
        %498 = vmatprep.subr.mxu0 0.0
        %499 = vmatpush1.msra.mxu0 0.0
        %500 = vmatprep.subr.mxu0 0.0
        %501 = vmatpush1.msra.mxu0 0.0
        %502 = vmatprep.subr.mxu0 0.0
        %503 = vmatpush1.msra.mxu0 0.0
        %504 = vmatprep.subr.mxu0 0.0
        %505 = vmatpush1.msra.mxu0 0.0
        %506 = vmatprep.subr.mxu0 0.0
        %507 = vmatpush1.msra.mxu0 0.0
        %508 = vmatprep.subr.mxu0 0.0
        %509 = vmatpush1.msra.mxu0 0.0
        %510 = vmatprep.subr.mxu0 0.0
        %511 = vmatpush1.msra.mxu0 0.0
        %512 = vmatprep.subr.mxu0 0.0
        %513 = vmatpush1.msra.mxu0 0.0
        %514 = vmatprep.subr.mxu0 0.0
        %515 = vmatpush1.msra.mxu0 0.0
        %516 = vmatprep.subr.mxu0 0.0
        %517 = vmatpush1.msra.mxu0 0.0
        %518 = vmatprep.subr.mxu0 0.0
        %519 = vmatpush1.msra.mxu0 0.0
        %520 = vmatprep.subr.mxu0 0.0
        %521 = vmatpush1.msra.mxu0 0.0
        %522 = vmatprep.subr.mxu0 0.0
        %523 = vmatpush1.msra.mxu0 0.0
        %524 = vmatprep.subr.mxu0 0.0
        %525 = vmatpush1.msra.mxu0 0.0
        %526 = vmatprep.subr.mxu0 0.0
        %527 = vmatpush1.msra.mxu0 0.0
        %528 = vmatprep.subr.mxu0 0.0
        %529 = vmatpush1.msra.mxu0 0.0
        %530 = vmatprep.subr.mxu0 0.0
        %531 = vmatpush1.msra.mxu0 0.0
        %532 = vmatprep.mubr.f32.mxu0 0.0
        %533 = vmatmul.mubr.f32.gmra.mrb[0].mxu0 %v466
        %v534 = vpop.f32.mrb[0].mxu0
        %v535 = vadd.f32 0.0, %v534
        %v536 = vpop.f32.mrb[0].mxu0
        %v537 = vadd.f32 0.0, %v536
        %538 = vdwg.mxu0
        %v540 = vcombine.high %v453, %v453
        %vm541 = vcmask 31744
        %v543 = vsel %vm541, %v462, 0
        %vm545 = vcmask 1043456
        %v546 = vsel %vm545, %v453, 0
        %v548 = vsel %vm545, %v540, 0
        %550 = vmatprep.subr.mxu0 %v548
        %551 = vmatpush1.msra.mxu0 %v546
        %552 = vmatprep.subr.mxu0 0.0
        %553 = vmatpush1.msra.mxu0 0.0
        %554 = vmatprep.subr.mxu0 0.0
        %555 = vmatpush1.msra.mxu0 0.0
        %556 = vmatprep.subr.mxu0 0.0
        %557 = vmatpush1.msra.mxu0 0.0
        %558 = vmatprep.subr.mxu0 0.0
        %559 = vmatpush1.msra.mxu0 0.0
        %560 = vmatprep.subr.mxu0 0.0
        %561 = vmatpush1.msra.mxu0 0.0
        %562 = vmatprep.subr.mxu0 0.0
        %563 = vmatpush1.msra.mxu0 0.0
        %564 = vmatprep.subr.mxu0 0.0
        %565 = vmatpush1.msra.mxu0 0.0
        %566 = vmatprep.subr.mxu0 0.0
        %567 = vmatpush1.msra.mxu0 0.0
        %568 = vmatprep.subr.mxu0 0.0
        %569 = vmatpush1.msra.mxu0 0.0
        %570 = vmatprep.subr.mxu0 0.0
        %571 = vmatpush1.msra.mxu0 0.0
        %572 = vmatprep.subr.mxu0 0.0
        %573 = vmatpush1.msra.mxu0 0.0
        %574 = vmatprep.subr.mxu0 0.0
        %575 = vmatpush1.msra.mxu0 0.0
        %576 = vmatprep.subr.mxu0 0.0
        %577 = vmatpush1.msra.mxu0 0.0
        %578 = vmatprep.subr.mxu0 0.0
        %579 = vmatpush1.msra.mxu0 0.0
        %580 = vmatprep.subr.mxu0 0.0
        %581 = vmatpush1.msra.mxu0 0.0
        %582 = vmatprep.subr.mxu0 0.0
        %583 = vmatpush1.msra.mxu0 0.0
        %584 = vmatprep.subr.mxu0 0.0
        %585 = vmatpush1.msra.mxu0 0.0
        %586 = vmatprep.subr.mxu0 0.0
        %587 = vmatpush1.msra.mxu0 0.0
        %588 = vmatprep.subr.mxu0 0.0
        %589 = vmatpush1.msra.mxu0 0.0
        %590 = vmatprep.subr.mxu0 0.0
        %591 = vmatpush1.msra.mxu0 0.0
        %592 = vmatprep.subr.mxu0 0.0
        %593 = vmatpush1.msra.mxu0 0.0
        %594 = vmatprep.subr.mxu0 0.0
        %595 = vmatpush1.msra.mxu0 0.0
        %596 = vmatprep.subr.mxu0 0.0
        %597 = vmatpush1.msra.mxu0 0.0
        %598 = vmatprep.subr.mxu0 0.0
        %599 = vmatpush1.msra.mxu0 0.0
        %600 = vmatprep.subr.mxu0 0.0
        %601 = vmatpush1.msra.mxu0 0.0
        %602 = vmatprep.subr.mxu0 0.0
        %603 = vmatpush1.msra.mxu0 0.0
        %604 = vmatprep.subr.mxu0 0.0
        %605 = vmatpush1.msra.mxu0 0.0
        %606 = vmatprep.subr.mxu0 0.0
        %607 = vmatpush1.msra.mxu0 0.0
        %608 = vmatprep.subr.mxu0 0.0
        %609 = vmatpush1.msra.mxu0 0.0
        %610 = vmatprep.subr.mxu0 0.0
        %611 = vmatpush1.msra.mxu0 0.0
        %612 = vmatprep.subr.mxu0 0.0
        %613 = vmatpush1.msra.mxu0 0.0
        %614 = vmatprep.mubr.f32.mxu0 0.0
        %615 = vmatmul.mubr.f32.gmra.mrb[0].mxu0 %v543
        %v616 = vpop.f32.mrb[0].mxu0
        %v617 = vadd.f32 %v535, %v616
        %v618 = vpop.f32.mrb[0].mxu0
        %v619 = vadd.f32 %v537, %v618
        %620 = vdwg.mxu0
        %s621 = sld [smem:[#allocation2]]
        %v622 = vstv %s621
        %v623 = vadd.f32 %v617, %v622
        %v624 = vadd.f32 %v619, %v622
        %v625 = vmax.f32 %v623, 0.0
        %v626 = vmax.f32 %v624, 0.0
        %v627 = vxor.u32 %v625, 2147483648
        %v628 = vxor.u32 %v626, 2147483648
        %v629 = vmul.f32 %v627, 1.442695
        %v630 = vpow.pop %v629
        %v631 = vmul.f32 %v628, 1.442695
        %v632 = vpow.pop %v631
        %v633 = vadd.f32 %v630, 1.0
        %v634 = vadd.f32 %v632, 1.0
        %v635 = vrcp.pop %v633
        %v636 = vmul.f32 1.0, %v635
        %v637 = vrcp.pop %v634
        %v638 = vmul.f32 1.0, %v637
        %v639 = vlaneseq
        %v640 = vshrl.u32 %v639, 7
        %v641 = vsub.s32 0, %v640
        %v642 = vrot.slane %v636, %v641
        %v643 = vlaneseq
        %v644 = vshrl.u32 %v643, 7
        %v645 = vsub.s32 0, %v644
        %v646 = vrot.slane %v638, %v645
        %v649 = vcombine.low %v642, %v646
        %v651 = vmul.f32 %v453, %v649
        %v652 = vld [vmem:[%s10] sm:$0xff]
        %v653 = vld [vmem:[%s11] sm:$0xff]
        %655 = vset.pattern.permute.xlu0 0
        %656 = vperm.xlu0 %655, %v653
        %v657 = vpop.permute.xlu0 %656
        %v660 = vcombine.high %v651, %v651
        %v662 = vsel %vm541, %v652, 0
        %v664 = vsel %vm545, %v651, 0
        %v666 = vsel %vm545, %v660, 0
        %668 = vmatprep.subr.mxu0 %v666
        %669 = vmatpush1.msra.mxu0 %v664
        %670 = vmatprep.subr.mxu0 0.0
        %671 = vmatpush1.msra.mxu0 0.0
        %672 = vmatprep.subr.mxu0 0.0
        %673 = vmatpush1.msra.mxu0 0.0
        %674 = vmatprep.subr.mxu0 0.0
        %675 = vmatpush1.msra.mxu0 0.0
        %676 = vmatprep.subr.mxu0 0.0
        %677 = vmatpush1.msra.mxu0 0.0
        %678 = vmatprep.subr.mxu0 0.0
        %679 = vmatpush1.msra.mxu0 0.0
        %680 = vmatprep.subr.mxu0 0.0
        %681 = vmatpush1.msra.mxu0 0.0
        %682 = vmatprep.subr.mxu0 0.0
        %683 = vmatpush1.msra.mxu0 0.0
        %684 = vmatprep.subr.mxu0 0.0
        %685 = vmatpush1.msra.mxu0 0.0
        %686 = vmatprep.subr.mxu0 0.0
        %687 = vmatpush1.msra.mxu0 0.0
        %688 = vmatprep.subr.mxu0 0.0
        %689 = vmatpush1.msra.mxu0 0.0
        %690 = vmatprep.subr.mxu0 0.0
        %691 = vmatpush1.msra.mxu0 0.0
        %692 = vmatprep.subr.mxu0 0.0
        %693 = vmatpush1.msra.mxu0 0.0
        %694 = vmatprep.subr.mxu0 0.0
        %695 = vmatpush1.msra.mxu0 0.0
        %696 = vmatprep.subr.mxu0 0.0
        %697 = vmatpush1.msra.mxu0 0.0
        %698 = vmatprep.subr.mxu0 0.0
        %699 = vmatpush1.msra.mxu0 0.0
        %700 = vmatprep.subr.mxu0 0.0
        %701 = vmatpush1.msra.mxu0 0.0
        %702 = vmatprep.subr.mxu0 0.0
        %703 = vmatpush1.msra.mxu0 0.0
        %704 = vmatprep.subr.mxu0 0.0
        %705 = vmatpush1.msra.mxu0 0.0
        %706 = vmatprep.subr.mxu0 0.0
        %707 = vmatpush1.msra.mxu0 0.0
        %708 = vmatprep.subr.mxu0 0.0
        %709 = vmatpush1.msra.mxu0 0.0
        %710 = vmatprep.subr.mxu0 0.0
        %711 = vmatpush1.msra.mxu0 0.0
        %712 = vmatprep.subr.mxu0 0.0
        %713 = vmatpush1.msra.mxu0 0.0
        %714 = vmatprep.subr.mxu0 0.0
        %715 = vmatpush1.msra.mxu0 0.0
        %716 = vmatprep.subr.mxu0 0.0
        %717 = vmatpush1.msra.mxu0 0.0
        %718 = vmatprep.subr.mxu0 0.0
        %719 = vmatpush1.msra.mxu0 0.0
        %720 = vmatprep.subr.mxu0 0.0
        %721 = vmatpush1.msra.mxu0 0.0
        %722 = vmatprep.subr.mxu0 0.0
        %723 = vmatpush1.msra.mxu0 0.0
        %724 = vmatprep.subr.mxu0 0.0
        %725 = vmatpush1.msra.mxu0 0.0
        %726 = vmatprep.subr.mxu0 0.0
        %727 = vmatpush1.msra.mxu0 0.0
        %728 = vmatprep.subr.mxu0 0.0
        %729 = vmatpush1.msra.mxu0 0.0
        %730 = vmatprep.subr.mxu0 0.0
        %731 = vmatpush1.msra.mxu0 0.0
        %732 = vmatprep.mubr.f32.mxu0 0.0
        %733 = vmatmul.mubr.f32.gmra.mrb[0].mxu0 %v662
        %v734 = vpop.f32.mrb[0].mxu0
        %v735 = vadd.f32 %v657, %v734
        %v736 = vpop.f32.mrb[0].mxu0
        %v737 = vadd.f32 %v657, %v736
        %738 = vdwg.mxu0
        %v740 = vsel %vm545, %v453, 0.0
        %v741 = vsel %vm545, %v540, 0.0
        %v742 = vadd.f32 %v740, %v741
        %743 = vadd.xlane.f32.xlu0 %v742
        %v744 = vpop.xlane.xlu0 %743
        %v745 = vrcp.pop 256.0
        %v746 = vmul.f32 %v744, %v745
        %v747 = vsel %vm545, %v453, -inf
        %v748 = vsel %vm545, %v540, -inf
        %v749 = vmax.f32 %v747, %v748
        %750 = vmax.xlane.f32.xlu0 %v749
        %v751 = vpop.xlane.xlu0 %750
        %v752 = vadd.f32 %v746, %v751
        %v753 = vadd.f32 %v454, %v455
        %754 = vadd.xlane.f32.xlu0 %v753
        %v755 = vpop.xlane.xlu0 %754
        %v756 = vadd.f32 %v456, %v457
        %757 = vadd.xlane.f32.xlu0 %v756
        %v758 = vpop.xlane.xlu0 %757
        %v759 = vadd.f32 %v458, %v459
        %760 = vadd.xlane.f32.xlu0 %v759
        %v761 = vpop.xlane.xlu0 %760
        %v762 = vadd.f32 %v460, %v461
        %763 = vadd.xlane.f32.xlu0 %v762
        %v764 = vpop.xlane.xlu0 %763
        %v765 = vmul.f32 %v755, %v745
        %v766 = vmul.f32 %v758, %v745
        %v767 = vmul.f32 %v761, %v745
        %v768 = vmul.f32 %v764, %v745
        %v769 = vmax.f32 %v454, %v455
        %770 = vmax.xlane.f32.xlu0 %v769
        %v771 = vpop.xlane.xlu0 %770
        %v772 = vmax.f32 %v456, %v457
        %773 = vmax.xlane.f32.xlu0 %v772
        %v774 = vpop.xlane.xlu0 %773
        %v775 = vmax.f32 %v458, %v459
        %776 = vmax.xlane.f32.xlu0 %v775
        %v777 = vpop.xlane.xlu0 %776
        %v778 = vmax.f32 %v460, %v461
        %779 = vmax.xlane.f32.xlu0 %v778
        %v780 = vpop.xlane.xlu0 %779
        %v781 = vadd.f32 %v765, %v771
        %v782 = vadd.f32 %v766, %v774
        %v783 = vadd.f32 %v767, %v777
        %v784 = vadd.f32 %v768, %v780
        %v785 = vld [vmem:[%s5] sm:$0x3]
        %v786 = vld [vmem:[%s6] sm:$0x3]
        %v788 = vsel %vm464, %v786, 0
        %790 = vmatprep.subr.mxu0 0.0
        %791 = vmatpush1.msra.mxu0 %v781
        %792 = vmatprep.subr.mxu0 0.0
        %793 = vmatpush1.msra.mxu0 %v782
        %794 = vmatprep.subr.mxu0 0.0
        %795 = vmatpush1.msra.mxu0 %v783
        %796 = vmatprep.subr.mxu0 0.0
        %797 = vmatpush1.msra.mxu0 %v784
        %798 = vmatprep.subr.mxu0 0.0
        %799 = vmatpush1.msra.mxu0 0.0
        %800 = vmatprep.subr.mxu0 0.0
        %801 = vmatpush1.msra.mxu0 0.0
        %802 = vmatprep.subr.mxu0 0.0
        %803 = vmatpush1.msra.mxu0 0.0
        %804 = vmatprep.subr.mxu0 0.0
        %805 = vmatpush1.msra.mxu0 0.0
        %806 = vmatprep.subr.mxu0 0.0
        %807 = vmatpush1.msra.mxu0 0.0
        %808 = vmatprep.subr.mxu0 0.0
        %809 = vmatpush1.msra.mxu0 0.0
        %810 = vmatprep.subr.mxu0 0.0
        %811 = vmatpush1.msra.mxu0 0.0
        %812 = vmatprep.subr.mxu0 0.0
        %813 = vmatpush1.msra.mxu0 0.0
        %814 = vmatprep.subr.mxu0 0.0
        %815 = vmatpush1.msra.mxu0 0.0
        %816 = vmatprep.subr.mxu0 0.0
        %817 = vmatpush1.msra.mxu0 0.0
        %818 = vmatprep.subr.mxu0 0.0
        %819 = vmatpush1.msra.mxu0 0.0
        %820 = vmatprep.subr.mxu0 0.0
        %821 = vmatpush1.msra.mxu0 0.0
        %822 = vmatprep.subr.mxu0 0.0
        %823 = vmatpush1.msra.mxu0 0.0
        %824 = vmatprep.subr.mxu0 0.0
        %825 = vmatpush1.msra.mxu0 0.0
        %826 = vmatprep.subr.mxu0 0.0
        %827 = vmatpush1.msra.mxu0 0.0
        %828 = vmatprep.subr.mxu0 0.0
        %829 = vmatpush1.msra.mxu0 0.0
        %830 = vmatprep.subr.mxu0 0.0
        %831 = vmatpush1.msra.mxu0 0.0
        %832 = vmatprep.subr.mxu0 0.0
        %833 = vmatpush1.msra.mxu0 0.0
        %834 = vmatprep.subr.mxu0 0.0
        %835 = vmatpush1.msra.mxu0 0.0
        %836 = vmatprep.subr.mxu0 0.0
        %837 = vmatpush1.msra.mxu0 0.0
        %838 = vmatprep.subr.mxu0 0.0
        %839 = vmatpush1.msra.mxu0 0.0
        %840 = vmatprep.subr.mxu0 0.0
        %841 = vmatpush1.msra.mxu0 0.0
        %842 = vmatprep.subr.mxu0 0.0
        %843 = vmatpush1.msra.mxu0 0.0
        %844 = vmatprep.subr.mxu0 0.0
        %845 = vmatpush1.msra.mxu0 0.0
        %846 = vmatprep.subr.mxu0 0.0
        %847 = vmatpush1.msra.mxu0 0.0
        %848 = vmatprep.subr.mxu0 0.0
        %849 = vmatpush1.msra.mxu0 0.0
        %850 = vmatprep.subr.mxu0 0.0
        %851 = vmatpush1.msra.mxu0 0.0
        %852 = vmatprep.subr.mxu0 0.0
        %853 = vmatpush1.msra.mxu0 0.0
        %854 = vmatprep.mubr.f32.mxu0 0.0
        %855 = vmatmul.mubr.f32.gmra.mrb[0].mxu0 %v788
        %v856 = vpop.f32.mrb[0].mxu0
        %v857 = vadd.f32 0.0, %v856
        %v858 = vpop.f32.mrb[0].mxu0
        %859 = vdwg.mxu0
        %v861 = vsel %vm541, %v785, 0
        %v864 = vsel %vm545, %v752, 0
        %866 = vmatprep.subr.mxu0 0.0
        %867 = vmatpush1.msra.mxu0 %v864
        %868 = vmatprep.subr.mxu0 0.0
        %869 = vmatpush1.msra.mxu0 0.0
        %870 = vmatprep.subr.mxu0 0.0
        %871 = vmatpush1.msra.mxu0 0.0
        %872 = vmatprep.subr.mxu0 0.0
        %873 = vmatpush1.msra.mxu0 0.0
        %874 = vmatprep.subr.mxu0 0.0
        %875 = vmatpush1.msra.mxu0 0.0
        %876 = vmatprep.subr.mxu0 0.0
        %877 = vmatpush1.msra.mxu0 0.0
        %878 = vmatprep.subr.mxu0 0.0
        %879 = vmatpush1.msra.mxu0 0.0
        %880 = vmatprep.subr.mxu0 0.0
        %881 = vmatpush1.msra.mxu0 0.0
        %882 = vmatprep.subr.mxu0 0.0
        %883 = vmatpush1.msra.mxu0 0.0
        %884 = vmatprep.subr.mxu0 0.0
        %885 = vmatpush1.msra.mxu0 0.0
        %886 = vmatprep.subr.mxu0 0.0
        %887 = vmatpush1.msra.mxu0 0.0
        %888 = vmatprep.subr.mxu0 0.0
        %889 = vmatpush1.msra.mxu0 0.0
        %890 = vmatprep.subr.mxu0 0.0
        %891 = vmatpush1.msra.mxu0 0.0
        %892 = vmatprep.subr.mxu0 0.0
        %893 = vmatpush1.msra.mxu0 0.0
        %894 = vmatprep.subr.mxu0 0.0
        %895 = vmatpush1.msra.mxu0 0.0
        %896 = vmatprep.subr.mxu0 0.0
        %897 = vmatpush1.msra.mxu0 0.0
        %898 = vmatprep.subr.mxu0 0.0
        %899 = vmatpush1.msra.mxu0 0.0
        %900 = vmatprep.subr.mxu0 0.0
        %901 = vmatpush1.msra.mxu0 0.0
        %902 = vmatprep.subr.mxu0 0.0
        %903 = vmatpush1.msra.mxu0 0.0
        %904 = vmatprep.subr.mxu0 0.0
        %905 = vmatpush1.msra.mxu0 0.0
        %906 = vmatprep.subr.mxu0 0.0
        %907 = vmatpush1.msra.mxu0 0.0
        %908 = vmatprep.subr.mxu0 0.0
        %909 = vmatpush1.msra.mxu0 0.0
        %910 = vmatprep.subr.mxu0 0.0
        %911 = vmatpush1.msra.mxu0 0.0
        %912 = vmatprep.subr.mxu0 0.0
        %913 = vmatpush1.msra.mxu0 0.0
        %914 = vmatprep.subr.mxu0 0.0
        %915 = vmatpush1.msra.mxu0 0.0
        %916 = vmatprep.subr.mxu0 0.0
        %917 = vmatpush1.msra.mxu0 0.0
        %918 = vmatprep.subr.mxu0 0.0
        %919 = vmatpush1.msra.mxu0 0.0
        %920 = vmatprep.subr.mxu0 0.0
        %921 = vmatpush1.msra.mxu0 0.0
        %922 = vmatprep.subr.mxu0 0.0
        %923 = vmatpush1.msra.mxu0 0.0
        %924 = vmatprep.subr.mxu0 0.0
        %925 = vmatpush1.msra.mxu0 0.0
        %926 = vmatprep.subr.mxu0 0.0
        %927 = vmatpush1.msra.mxu0 0.0
        %928 = vmatprep.subr.mxu0 0.0
        %929 = vmatpush1.msra.mxu0 0.0
        %930 = vmatprep.mubr.f32.mxu0 0.0
        %931 = vmatmul.mubr.f32.gmra.mrb[0].mxu0 %v861
        %v932 = vpop.f32.mrb[0].mxu0
        %v933 = vadd.f32 %v857, %v932
        %v934 = vpop.f32.mrb[0].mxu0
        %935 = vdwg.mxu0
        %v936 = vld [vmem:[%s7] sm:$0x3]
        %v937 = vadd.f32 %v933, %v936
        %v938 = vld [vmem:[%s8] sm:$0xff]
        %v939 = vld [vmem:[%s9] sm:$0xff]
        %vm940 = vcmask 15360
        %v942 = vsel %vm940, %v938, 0
        %vm944 = vcmask 1041408
        %v946 = vsel %vm944, %v937, 0
        %948 = vmatprep.subr.mxu0 0.0
        %949 = vmatpush1.msra.mxu0 %v946
        %950 = vmatprep.subr.mxu0 0.0
        %951 = vmatpush1.msra.mxu0 0.0
        %952 = vmatprep.subr.mxu0 0.0
        %953 = vmatpush1.msra.mxu0 0.0
        %954 = vmatprep.subr.mxu0 0.0
        %955 = vmatpush1.msra.mxu0 0.0
        %956 = vmatprep.subr.mxu0 0.0
        %957 = vmatpush1.msra.mxu0 0.0
        %958 = vmatprep.subr.mxu0 0.0
        %959 = vmatpush1.msra.mxu0 0.0
        %960 = vmatprep.subr.mxu0 0.0
        %961 = vmatpush1.msra.mxu0 0.0
        %962 = vmatprep.subr.mxu0 0.0
        %963 = vmatpush1.msra.mxu0 0.0
        %964 = vmatprep.subr.mxu0 0.0
        %965 = vmatpush1.msra.mxu0 0.0
        %966 = vmatprep.subr.mxu0 0.0
        %967 = vmatpush1.msra.mxu0 0.0
        %968 = vmatprep.subr.mxu0 0.0
        %969 = vmatpush1.msra.mxu0 0.0
        %970 = vmatprep.subr.mxu0 0.0
        %971 = vmatpush1.msra.mxu0 0.0
        %972 = vmatprep.subr.mxu0 0.0
        %973 = vmatpush1.msra.mxu0 0.0
        %974 = vmatprep.subr.mxu0 0.0
        %975 = vmatpush1.msra.mxu0 0.0
        %976 = vmatprep.subr.mxu0 0.0
        %977 = vmatpush1.msra.mxu0 0.0
        %978 = vmatprep.subr.mxu0 0.0
        %979 = vmatpush1.msra.mxu0 0.0
        %980 = vmatprep.subr.mxu0 0.0
        %981 = vmatpush1.msra.mxu0 0.0
        %982 = vmatprep.subr.mxu0 0.0
        %983 = vmatpush1.msra.mxu0 0.0
        %984 = vmatprep.subr.mxu0 0.0
        %985 = vmatpush1.msra.mxu0 0.0
        %986 = vmatprep.subr.mxu0 0.0
        %987 = vmatpush1.msra.mxu0 0.0
        %988 = vmatprep.subr.mxu0 0.0
        %989 = vmatpush1.msra.mxu0 0.0
        %990 = vmatprep.subr.mxu0 0.0
        %991 = vmatpush1.msra.mxu0 0.0
        %992 = vmatprep.subr.mxu0 0.0
        %993 = vmatpush1.msra.mxu0 0.0
        %994 = vmatprep.subr.mxu0 0.0
        %995 = vmatpush1.msra.mxu0 0.0
        %996 = vmatprep.subr.mxu0 0.0
        %997 = vmatpush1.msra.mxu0 0.0
        %998 = vmatprep.subr.mxu0 0.0
        %999 = vmatpush1.msra.mxu0 0.0
        %1000 = vmatprep.subr.mxu0 0.0
        %1001 = vmatpush1.msra.mxu0 0.0
        %1002 = vmatprep.subr.mxu0 0.0
        %1003 = vmatpush1.msra.mxu0 0.0
        %1004 = vmatprep.subr.mxu0 0.0
        %1005 = vmatpush1.msra.mxu0 0.0
        %1006 = vmatprep.subr.mxu0 0.0
        %1007 = vmatpush1.msra.mxu0 0.0
        %1008 = vmatprep.subr.mxu0 0.0
        %1009 = vmatpush1.msra.mxu0 0.0
        %1010 = vmatprep.subr.mxu0 0.0
        %1011 = vmatpush1.msra.mxu0 0.0
        %1012 = vmatprep.mubr.f32.mxu0 0.0
        %1013 = vmatmul.mubr.f32.gmra.mrb[0].mxu0 %v942
        %v1014 = vpop.f32.mrb[0].mxu0
        %v1015 = vadd.f32 %v939, %v1014
        %v1016 = vpop.f32.mrb[0].mxu0
        %1017 = vdwg.mxu0
        %v1018 = vmax.f32 %v1015, 0.0
        %v1019 = vxor.u32 %v1018, 2147483648
        %v1020 = vmul.f32 %v1019, 1.442695
        %v1021 = vpow.pop %v1020
        %v1022 = vadd.f32 %v1021, 1.0
        %v1023 = vrcp.pop %v1022
        %v1024 = vmul.f32 1.0, %v1023
        %1026 = vset.pattern.permute.xlu0 0
        %1027 = vperm.xlu0 %1026, %v1024
        %v1028 = vpop.permute.xlu0 %1027
        %v1030 = vmul.f32 %v735, %v1028
        %v1031 = vmul.f32 %v737, %v1028
        %1032 = vst [vmem:[%s447] sm:$0xff] %v1030
        %1033 = vst [vmem:[%s447 + $0x8] sm:$0xff] %v1031
        %s1034 = sand.u32 %s300, 1
        %s1035 = scalar_lea.sflag [#allocation5], %s1034
        %s1036 = sand.u32 %s300, 1
        %s1037 = smul.addr %s1036, 16
        %s1038 = scalar_lea.vmem [#allocation6], %s1037
        // Predicated region
        $region73: #{tpu_custom_call.1} parent=67 // pred_check
          %p1039 = pneg %p310
        $region74: #{tpu_custom_call.1} parent=67 // pred_check_branch
          %1041 = sbr.rel (%p1039) target = $region76
        $region75: #{tpu_custom_call.1} parent=67 // pred_region
          %s1043 = ssub.s32 256, 256
          %1044 = vsyncadd %s1035, %s1043
          %s1045 = smul.addr %s30, 2
          %s1046 = smul.addr %s1045, 128
          %s1047 = scalar_lea.hbm %s12, %s1046
          %s1049 = sshll.u32 %s1038, 4
          %s1050 = int_to_ptr.vmem [resolvable:$true] %s1049
          %1052 = dma.vmem_to_hbm [thread:$0]  %s1050, 256, %s1047, %s1035
        $region76: #{tpu_custom_call.1} parent=67 // pred_fallthru
          _
      $region68: #{tpu_custom_call.1} parent=5 // pred_fallthru
        _
      %p1053 = scmp.le.s32.totalorder 2, %s25
      // Predicated region
      $region77: #{tpu_custom_call.1} parent=5 // pred_check
        %p1054 = pneg %p1053
      $region78: #{tpu_custom_call.1} parent=5 // pred_check_branch
        %1056 = sbr.rel (%p1054) target = $region80
      $region79: #{tpu_custom_call.1} parent=5 // pred_region
        %s1057 = ssub.s32 %s25, 2
        // Predicated region
        $region81: #{tpu_custom_call.1} parent=79 // pred_check
          %p1058 = pneg %p316
        $region82: #{tpu_custom_call.1} parent=79 // pred_check_branch
          %1060 = sbr.rel (%p1058) target = $region84
        $region83: #{tpu_custom_call.1} parent=79 // pred_region
          %s1061 = sand.u32 %s301, 1
          %s1062 = scalar_lea.sflag [#allocation5], %s1061
          %s1063 = sand.u32 %s301, 1
          %s1064 = smul.addr %s1063, 16
          %s1065 = scalar_lea.vmem [#allocation6], %s1064
          %1066 = dma.done %s1062, 256
        $region84: #{tpu_custom_call.1} parent=79 // pred_fallthru
          _
      $region80: #{tpu_custom_call.1} parent=5 // pred_fallthru
        _
    $region6: #{tpu_custom_call.1} parent=1 // loop_footer
      %s29 = sadd.s32 1, %s25
    $region7: #{tpu_custom_call.1} parent=1 // loop_footer_branch
      %24 = sbr.rel target = $region3
    $region8: #{tpu_custom_call.1} parent=1 // loop_exit
      _
    %1067 = vsyncpa [#allocation4], 1
    %s1068 = scalar_lea.sflag [#allocation4], 1
    %1069 = vsyncpa %s1068, 1
    %1070 = vsyncpa [#allocation5], 1
    %s1071 = scalar_lea.sflag [#allocation5], 1
    %1072 = vsyncpa %s1071, 1

</llo_original>
